<compile_context>
chip_gen: v7x
topology: tpu7x:2x2x1
jax: 0.10.0
libtpu: 0.0.40
codegen_flags: <defaults>
</compile_context>

<pallas_src>
import jax
import jax.numpy as jnp
from jax.experimental import pallas as pl
from jax.experimental.pallas import tpu as pltpu

_BN_EPS = 1e-5


def _adapter_kernel(x_ref, w_ref, bn_ref, o_ref):
    # x_ref : (1, C, TILE_P)  input pixels (channels = sublanes, pixels = lanes)
    # w_ref : (C, C)          block-diagonal grouped 1x1-conv weight (out, in)
    # bn_ref: (4, C, 1)       rows = (scale1, bias1, scale2, bias2)  eval-mode BN
    # o_ref : (1, C, TILE_P)
    x = x_ref[0]                                   # (C, TILE_P)
    s1 = bn_ref[0]
    b1 = bn_ref[1]
    s2 = bn_ref[2]
    b2 = bn_ref[3]

    h = s1 * x + b1                                # bn1 (eval-mode affine)
    y = jnp.dot(w_ref[...], h,                     # grouped 1x1 conv (block-diag)
                preferred_element_type=jnp.float32)
    z = s2 * (y + x.astype(jnp.float32)) + b2      # residual add + bn2 (eval)
    o_ref[0] = jnp.clip(z, -1.0, 1.0).astype(o_ref.dtype)   # hardtanh


def conv_channel_adapter3_forward(x_nchw, group_weights, bn1_params, bn2_params,
                                  *, tile_p=512):
    """Eval-mode forward of conv_channel_adapter3.

    x_nchw:        (B, C, H, W)
    group_weights: (G, cps, cps) per-group 1x1 conv weights, (out_ch, in_ch);
                   this is torch `conv.weight` (C, cps, 1, 1) reshaped to groups.
    bn{1,2}_params: tuples (gamma, beta, running_mean, running_var), each (C,).
    """
    B, C, H, W = x_nchw.shape
    G, cps, cps2 = group_weights.shape
    assert cps == cps2 and G * cps == C, "weights must tile the channel axis"
    HW = H * W

    # ---- fold parameters once (O(C^2), outside the pixel loop) -------------
    def _affine(p):
        gamma, beta, mean, var = [a.astype(jnp.float32) for a in p]
        s = gamma / jnp.sqrt(var + _BN_EPS)
        return s, beta - mean * s

    s1, b1 = _affine(bn1_params)
    s2, b2 = _affine(bn2_params)
    bn = jnp.stack([s1, b1, s2, b2]).reshape(4, C, 1)

    w_bd = jnp.zeros((C, C), jnp.float32)
    for g in range(G):
        w_bd = w_bd.at[g * cps:(g + 1) * cps, g * cps:(g + 1) * cps].set(
            group_weights[g].astype(jnp.float32))

    # ---- pixel tiling (lane dimension) --------------------------------------
    if HW <= tile_p:
        tp = HW                              # full extent (always legal)
    else:
        tp = max(128, (tile_p // 128) * 128)  # lane-dense multiple of 128
    n_p = pl.cdiv(HW, tp)

    x3 = x_nchw.reshape(B, C, HW)            # trailing-dim reshape: no copy

    out = pl.pallas_call(
        _adapter_kernel,
        out_shape=jax.ShapeDtypeStruct((B, C, HW), x_nchw.dtype),
        grid_spec=pltpu.PrefetchScalarGridSpec(
            num_scalar_prefetch=0,
            grid=(n_p, B),                   # pixel tiles outermost (megacore)
            in_specs=[
                pl.BlockSpec((1, C, tp), lambda p, b: (b, 0, p)),
                pl.BlockSpec((C, C), lambda p, b: (0, 0)),
                pl.BlockSpec((4, C, 1), lambda p, b: (0, 0, 0)),
            ],
            out_specs=pl.BlockSpec((1, C, tp), lambda p, b: (b, 0, p)),
        ),
        compiler_params=pltpu.CompilerParams(
            dimension_semantics=("parallel", "parallel")),
    )(x3, w_bd, bn)

    return out.reshape(B, C, H, W)


def _reference_forward(x, group_weights, bn1, bn2):
    """Pure-JAX reference matching torch eval-mode semantics."""
    B, C, H, W = x.shape
    G, cps, _ = group_weights.shape

    def aff(p):
        g, b, m, v = p
        s = g / jnp.sqrt(v + _BN_EPS)
        return s, b - m * s

    s1, b1 = aff(bn1)
    s2, b2 = aff(bn2)
    h = x * s1[None, :, None, None] + b1[None, :, None, None]
    hg = h.reshape(B, G, cps, H, W)
    yg = jnp.einsum('goc,bgchw->bgohw', group_weights, hg)
    y = yg.reshape(B, C, H, W)
    z = (y + x) * s2[None, :, None, None] + b2[None, :, None, None]
    return jnp.clip(z, -1.0, 1.0)


if __name__ == "__main__":
    B, C, H, W = 2, 8, 32, 32

    key = jax.random.PRNGKey(0)
    kx, kw1, kw2, k1, k2 = jax.random.split(key, 5)

    x = jax.random.normal(kx, (B, C, H, W), dtype=jnp.float32)

    def make_bn(k):
        kg, kb, km, kv = jax.random.split(k, 4)
        gamma = 1.0 + 0.1 * jax.random.normal(kg, (C,), jnp.float32)
        beta = 0.1 * jax.random.normal(kb, (C,), jnp.float32)
        mean = 0.1 * jax.random.normal(km, (C,), jnp.float32)
        var = jax.nn.softplus(jax.random.normal(kv, (C,), jnp.float32)) + 0.5
        return gamma, beta, mean, var

    bn1 = make_bn(k1)
    bn2 = make_bn(k2)

    # --- config A: groups=2  (cps = 4) --------------------------------------
    GROUPS_A = 2
    CPS_A = C // GROUPS_A
    bound_a = 1.0 / jnp.sqrt(jnp.float32(CPS_A))
    wg_a = jax.random.uniform(kw1, (GROUPS_A, CPS_A, CPS_A), jnp.float32,
                              minval=-bound_a, maxval=bound_a)
    y_a = jax.block_until_ready(conv_channel_adapter3_forward(x, wg_a, bn1, bn2))
    y_a_ref = _reference_forward(x, wg_a, bn1, bn2)
    assert y_a.shape == (B, C, H, W)
    assert jnp.allclose(y_a, y_a_ref, atol=1e-5, rtol=1e-5)

    # --- config B: default groups = in_channels (depthwise 1x1, cps = 1) -----
    wg_b = jax.random.uniform(kw2, (C, 1, 1), jnp.float32, minval=-1.0, maxval=1.0)
    y_b = jax.block_until_ready(conv_channel_adapter3_forward(x, wg_b, bn1, bn2))
    y_b_ref = _reference_forward(x, wg_b, bn1, bn2)
    assert jnp.allclose(y_b, y_b_ref, atol=1e-5, rtol=1e-5)

    print("KERNEL_OK")
</pallas_src>

<mosaic_0001>
module attributes {stable_mosaic.version = 11 : i64} {
  func.func @_adapter_kernel(%arg0: i32, %arg1: i32, %arg2: memref<1x8x512xf32, #tpu.memory_space<vmem>>, %arg3: memref<8x8xf32, #tpu.memory_space<vmem>>, %arg4: memref<4x8x1xf32, #tpu.memory_space<vmem>>, %arg5: memref<1x8x512xf32, #tpu.memory_space<vmem>>) attributes {dimension_semantics = [#tpu.dimension_semantics<parallel>, #tpu.dimension_semantics<parallel>], iteration_bounds = array<i64: 2, 2>, scalar_prefetch = 0 : i64, scratch_operands = 0 : i64, tpu.core_type = #tpu.core_type<tc>, window_params = [{transform_indices = @transform_0, window_bounds = array<i64: 1, 8, 512>}, {pipeline_mode = #tpu.pipeline_mode<synchronous>, transform_indices = @transform_1, window_bounds = array<i64: 8, 8>}, {pipeline_mode = #tpu.pipeline_mode<synchronous>, transform_indices = @transform_2, window_bounds = array<i64: 4, 8, 1>}, {transform_indices = @transform_3, window_bounds = array<i64: 1, 8, 512>}]} {
    %c0 = arith.constant 0 : index
    %c0_0 = arith.constant 0 : index
    %c0_1 = arith.constant 0 : index
    %0 = vector.load %arg2[%c0, %c0_0, %c0_1] : memref<1x8x512xf32, #tpu.memory_space<vmem>>, vector<1x8x512xf32>
    %1 = vector.shape_cast %0 : vector<1x8x512xf32> to vector<8x512xf32>
    %c0_2 = arith.constant 0 : index
    %c0_3 = arith.constant 0 : index
    %c0_4 = arith.constant 0 : index
    %2 = vector.load %arg4[%c0_2, %c0_3, %c0_4] : memref<4x8x1xf32, #tpu.memory_space<vmem>>, vector<1x8x1xf32>
    %3 = vector.shape_cast %2 : vector<1x8x1xf32> to vector<8x1xf32>
    %c1 = arith.constant 1 : index
    %c0_5 = arith.constant 0 : index
    %c0_6 = arith.constant 0 : index
    %4 = vector.load %arg4[%c1, %c0_5, %c0_6] : memref<4x8x1xf32, #tpu.memory_space<vmem>>, vector<1x8x1xf32>
    %5 = vector.shape_cast %4 : vector<1x8x1xf32> to vector<8x1xf32>
    %c2 = arith.constant 2 : index
    %c0_7 = arith.constant 0 : index
    %c0_8 = arith.constant 0 : index
    %6 = vector.load %arg4[%c2, %c0_7, %c0_8] : memref<4x8x1xf32, #tpu.memory_space<vmem>>, vector<1x8x1xf32>
    %7 = vector.shape_cast %6 : vector<1x8x1xf32> to vector<8x1xf32>
    %c3 = arith.constant 3 : index
    %c0_9 = arith.constant 0 : index
    %c0_10 = arith.constant 0 : index
    %8 = vector.load %arg4[%c3, %c0_9, %c0_10] : memref<4x8x1xf32, #tpu.memory_space<vmem>>, vector<1x8x1xf32>
    %9 = vector.shape_cast %8 : vector<1x8x1xf32> to vector<8x1xf32>
    %10 = vector.broadcast %3 : vector<8x1xf32> to vector<8x512xf32>
    %11 = arith.mulf %10, %1 : vector<8x512xf32>
    %12 = vector.broadcast %5 : vector<8x1xf32> to vector<8x512xf32>
    %13 = arith.addf %11, %12 : vector<8x512xf32>
    %c0_11 = arith.constant 0 : index
    %c0_12 = arith.constant 0 : index
    %14 = vector.load %arg3[%c0_11, %c0_12] : memref<8x8xf32, #tpu.memory_space<vmem>>, vector<8x8xf32>
    %cst = arith.constant dense<0.000000e+00> : vector<8x512xf32>
    %15 = tpu.matmul %14, %13, %cst {dimension_numbers = #tpu.dot_dimension_numbers<[1], [0], [0], [1], [0, 0, 1, 1], [], []>} : vector<8x8xf32>, vector<8x512xf32>, vector<8x512xf32> -> vector<8x512xf32>
    %16 = arith.addf %15, %1 : vector<8x512xf32>
    %17 = vector.broadcast %7 : vector<8x1xf32> to vector<8x512xf32>
    %18 = arith.mulf %17, %16 : vector<8x512xf32>
    %19 = vector.broadcast %9 : vector<8x1xf32> to vector<8x512xf32>
    %20 = arith.addf %18, %19 : vector<8x512xf32>
    %cst_13 = arith.constant -1.000000e+00 : f32
    %cst_14 = arith.constant 1.000000e+00 : f32
    %21 = vector.broadcast %cst_13 : f32 to vector<8x512xf32>
    %22 = arith.maximumf %21, %20 : vector<8x512xf32>
    %23 = vector.broadcast %cst_14 : f32 to vector<8x512xf32>
    %24 = arith.minimumf %23, %22 : vector<8x512xf32>
    %c0_15 = arith.constant 0 : index
    %c0_16 = arith.constant 0 : index
    %c0_17 = arith.constant 0 : index
    %25 = vector.load %arg5[%c0_15, %c0_16, %c0_17] : memref<1x8x512xf32, #tpu.memory_space<vmem>>, vector<1x8x512xf32>
    %26 = vector.shape_cast %25 : vector<1x8x512xf32> to vector<8x512xf32>
    %27 = vector.shape_cast %24 : vector<8x512xf32> to vector<1x8x512xf32>
    tpu.vector_store %arg5[%c0_15, %c0_16, %c0_17], %27 {strides = array<i32>} : memref<1x8x512xf32, #tpu.memory_space<vmem>>, vector<1x8x512xf32>,
    return
  }
  func.func @transform_0(%arg0: i32, %arg1: i32) -> (i32, i32, i32) {
    %c0_i32 = arith.constant 0 : i32
    %c0_i32_0 = arith.constant 0 : i32
    return %arg1, %c0_i32, %arg0 : i32, i32, i32
  }
  func.func @transform_1(%arg0: i32, %arg1: i32) -> (i32, i32) {
    %c0_i32 = arith.constant 0 : i32
    %c0_i32_0 = arith.constant 0 : i32
    %c0_i32_1 = arith.constant 0 : i32
    return %c0_i32, %c0_i32_0 : i32, i32
  }
  func.func @transform_2(%arg0: i32, %arg1: i32) -> (i32, i32, i32) {
    %c0_i32 = arith.constant 0 : i32
    %c0_i32_0 = arith.constant 0 : i32
    %c0_i32_1 = arith.constant 0 : i32
    %c0_i32_2 = arith.constant 0 : i32
    return %c0_i32, %c0_i32_0, %c0_i32_1 : i32, i32, i32
  }
  func.func @transform_3(%arg0: i32, %arg1: i32) -> (i32, i32, i32) {
    %c0_i32 = arith.constant 0 : i32
    %c0_i32_0 = arith.constant 0 : i32
    return %arg1, %c0_i32, %arg0 : i32, i32, i32
  }
}

</mosaic_0001>

<llo_original>
// kernel: tpu_custom_call.1
$region0: #{tpu_custom_call.1}
  #allocation0 [shape = 'u32[]', space=smem, size = 0x4, offset = 0x4, fixed_abs, tag = 'smem constant byte address 0x4 - core index']
  #allocation1 [shape = 'u32[144,128]{1,0:T(1,128)}', space=vmem, size = 0x12000, scoped, tag = 'internal scratch']
  %s0 = inlined_call_operand.hbm [shape: f32[2,8,1024], index: 0, kind: input, shape index: {}]
  %s1 = inlined_call_operand.vmem [shape: f32[8,8], index: 1, kind: input, shape index: {}]
  %s2 = inlined_call_operand.vmem [shape: f32[4,8,1], index: 2, kind: input, shape index: {}]
  %s3 = inlined_call_operand.hbm [shape: f32[2,8,1024], index: 3, kind: output, shape index: {}]
  %s4 = sld [smem:[#allocation0]]
  $region49: #{tpu_custom_call.1} parent=0
    _
  %s6 = ssub.s32 1, %s4
  %s7 = scalar_select 0, %s6, %s4
  $region1: #{tpu_custom_call.1} parent=0
    #allocation2 [shape = 'u8[32768]{0}', space=vmem, size = 0x8000, scoped, tag = 'input window, operand 0']
    #allocation3 [shape = 's32[2]{0}', space=sflag, size = 0x8, scoped, tag = 'scoped memory for tpu_custom_call.1']
    #allocation4 [shape = 's32[2]{0}', space=sflag, size = 0x8, scoped, tag = 'scoped memory for tpu_custom_call.1']
    #allocation5 [shape = 'u8[32768]{0}', space=vmem, size = 0x8000, scoped, tag = 'output window, operand 0']
    %8 = vsyncpa [#allocation3], 0
    %s9 = scalar_lea.sflag [#allocation3], 1
    %10 = vsyncpa %s9, 0
    %11 = vsyncpa [#allocation4], 0
    %s12 = scalar_lea.sflag [#allocation4], 1
    %13 = vsyncpa %s12, 0
    loop: start=0, step=1, limit=6
    $region2: #{tpu_custom_call.1} parent=1 // loop_pre_header
      _
    $region3: #{tpu_custom_call.1} parent=1 // loop_header
      %s15 = sphi 0, %s19
      %p16 = scmp.ge.s32.totalorder %s15, 6
      %s22 = sphi 0, %s34
      %s23 = sphi 0, %s30
      %s24 = sphi 0, %s22
      %s25 = sphi 0, %s23
      %s26 = sphi 0, %s24
      %s27 = sphi 0, %s25
      %s39 = sphi 0, %s41
      %s42 = sphi 0, %s39
      %s43 = sphi 0, %s42
      %s59 = sphi 0, %s43
      %s63 = sphi 0, %s63
      %s65 = sphi 0, %s63
      %s66 = sphi 0, %s65
      %s80 = sphi 0, %s66
      %s84 = sphi 0, %s84
      %s86 = sphi 0, %s84
      %s87 = sphi 0, %s86
      %s101 = sphi 0, %s87
      %s109 = sphi 0, %s111
      %s112 = sphi 0, %s109
      %s113 = sphi 0, %s112
      %s129 = sphi 0, %s113
    $region4: #{tpu_custom_call.1} parent=1 // loop_header_branch
      %18 = sbr.rel (%p16) target = $region8
    $region5: #{tpu_custom_call.1} parent=1 // loop_body
      %s20 = ssub.s32 %s15, 1
      %s21 = ssub.s32 %s15, 2
      %s28 = sadd.s32 1, %s23
      %p29 = scmp.ge.s32.totalorder %s28, 2
      %s30 = scalar_select %p29, 0, %s28
      %s31 = sadd.s32 1, %s22
      %s32 = scalar_select %p29, %s31, %s22
      %p33 = scmp.ge.s32.totalorder %s32, 2
      %s34 = scalar_select %p33, 0, %s32
      %s35 = ssub.s32 %s23, %s30
      %s36 = ssub.s32 %s22, %s34
      %s37 = sor.u32 %s35, %s36
      %p38 = scmp.eq.s32.totalorder %s37, 0
      %s40 = sadd.s32 %s39, 1
      %s41 = scalar_select %p38, %s39, %s40
      %p44 = pneg %p38
      %p45 = scmp.eq.s32.totalorder %s15, 3
      %p46 = por %p44, %p45
      %p47 = scmp.ne.s32.totalorder %s39, %s42
      %p48 = scmp.eq.s32.totalorder %s15, 0
      %p49 = por %p47, %p48
      %p50 = scmp.ne.s32.totalorder %s39, %s42
      %p51 = scmp.eq.s32.totalorder %s20, 3
      %p52 = por %p50, %p51
      %p53 = scmp.ne.s32.totalorder %s42, %s43
      %p54 = scmp.eq.s32.totalorder %s20, 0
      %p55 = por %p53, %p54
      %p56 = scmp.ne.s32.totalorder %s42, %s43
      %p57 = scmp.eq.s32.totalorder %s21, 3
      %p58 = por %p56, %p57
      %p60 = scmp.ne.s32.totalorder %s43, %s59
      %p61 = scmp.eq.s32.totalorder %s21, 0
      %p62 = por %p60, %p61
      %s64 = sadd.s32 %s63, 1
      %p67 = scmp.eq.s32.totalorder %s15, 3
      %p68 = scmp.ne.s32.totalorder %s63, %s65
      %p69 = scmp.eq.s32.totalorder %s15, 0
      %p70 = por %p68, %p69
      %p71 = scmp.ne.s32.totalorder %s63, %s65
      %p72 = scmp.eq.s32.totalorder %s20, 3
      %p73 = por %p71, %p72
      %p74 = scmp.ne.s32.totalorder %s65, %s66
      %p75 = scmp.eq.s32.totalorder %s20, 0
      %p76 = por %p74, %p75
      %p77 = scmp.ne.s32.totalorder %s65, %s66
      %p78 = scmp.eq.s32.totalorder %s21, 3
      %p79 = por %p77, %p78
      %p81 = scmp.ne.s32.totalorder %s66, %s80
      %p82 = scmp.eq.s32.totalorder %s21, 0
      %p83 = por %p81, %p82
      %s85 = sadd.s32 %s84, 1
      %p88 = scmp.eq.s32.totalorder %s15, 3
      %p89 = scmp.ne.s32.totalorder %s84, %s86
      %p90 = scmp.eq.s32.totalorder %s15, 0
      %p91 = por %p89, %p90
      %p92 = scmp.ne.s32.totalorder %s84, %s86
      %p93 = scmp.eq.s32.totalorder %s20, 3
      %p94 = por %p92, %p93
      %p95 = scmp.ne.s32.totalorder %s86, %s87
      %p96 = scmp.eq.s32.totalorder %s20, 0
      %p97 = por %p95, %p96
      %p98 = scmp.ne.s32.totalorder %s86, %s87
      %p99 = scmp.eq.s32.totalorder %s21, 3
      %p100 = por %p98, %p99
      %p102 = scmp.ne.s32.totalorder %s87, %s101
      %p103 = scmp.eq.s32.totalorder %s21, 0
      %p104 = por %p102, %p103
      %s105 = ssub.s32 %s23, %s30
      %s106 = ssub.s32 %s22, %s34
      %s107 = sor.u32 %s105, %s106
      %p108 = scmp.eq.s32.totalorder %s107, 0
      %s110 = sadd.s32 %s109, 1
      %s111 = scalar_select %p108, %s109, %s110
      %p114 = pneg %p108
      %p115 = scmp.eq.s32.totalorder %s15, 3
      %p116 = por %p114, %p115
      %p117 = scmp.ne.s32.totalorder %s109, %s112
      %p118 = scmp.eq.s32.totalorder %s15, 0
      %p119 = por %p117, %p118
      %p120 = scmp.ne.s32.totalorder %s109, %s112
      %p121 = scmp.eq.s32.totalorder %s20, 3
      %p122 = por %p120, %p121
      %p123 = scmp.ne.s32.totalorder %s112, %s113
      %p124 = scmp.eq.s32.totalorder %s20, 0
      %p125 = por %p123, %p124
      %p126 = scmp.ne.s32.totalorder %s112, %s113
      %p127 = scmp.eq.s32.totalorder %s21, 3
      %p128 = por %p126, %p127
      %p130 = scmp.ne.s32.totalorder %s113, %s129
      %p131 = scmp.eq.s32.totalorder %s21, 0
      %p132 = por %p130, %p131
      %p133 = scmp.le.s32.totalorder 1, %s15
      %p134 = scmp.lt.s32.totalorder %s15, 5
      %p135 = pnand %p133, %p134
      %p136 = pneg %p135
      // Predicated region
      $region9: #{tpu_custom_call.1} parent=5 // pred_check
        _
      $region10: #{tpu_custom_call.1} parent=5 // pred_check_branch
        %138 = sbr.rel (%p135) target = $region12
      $region11: #{tpu_custom_call.1} parent=5 // pred_region
        %s139 = ssub.s32 %s15, 1
        // Predicated region
        $region13: #{tpu_custom_call.1} parent=11 // pred_check
          %p140 = pneg %p76
        $region14: #{tpu_custom_call.1} parent=11 // pred_check_branch
          %142 = sbr.rel (%p140) target = $region16
        $region15: #{tpu_custom_call.1} parent=11 // pred_region
          _
        $region16: #{tpu_custom_call.1} parent=11 // pred_fallthru
          _
        // Predicated region
        $region17: #{tpu_custom_call.1} parent=11 // pred_check
          %p143 = pneg %p97
        $region18: #{tpu_custom_call.1} parent=11 // pred_check_branch
          %145 = sbr.rel (%p143) target = $region20
        $region19: #{tpu_custom_call.1} parent=11 // pred_region
          _
        $region20: #{tpu_custom_call.1} parent=11 // pred_fallthru
          _
      $region12: #{tpu_custom_call.1} parent=5 // pred_fallthru
        _
      %p146 = scmp.lt.s32.totalorder %s15, 4
      // Predicated region
      $region21: #{tpu_custom_call.1} parent=5 // pred_check
        %p147 = pneg %p146
      $region22: #{tpu_custom_call.1} parent=5 // pred_check_branch
        %149 = sbr.rel (%p147) target = $region24
      $region23: #{tpu_custom_call.1} parent=5 // pred_region
        // Predicated region
        $region25: #{tpu_custom_call.1} parent=23 // pred_check
          %p150 = pneg %p49
        $region26: #{tpu_custom_call.1} parent=23 // pred_check_branch
          %152 = sbr.rel (%p150) target = $region28
        $region27: #{tpu_custom_call.1} parent=23 // pred_region
          %s153 = sand.u32 %s39, 1
          %s154 = scalar_lea.sflag [#allocation3], %s153
          %s155 = sand.u32 %s39, 1
          %s156 = smul.addr %s155, 32
          %s157 = scalar_lea.vmem [#allocation2], %s156
          %s158 = smul.u32 4, %s22
          %s160 = ssub.s32 512, 512
          %161 = vsyncadd %s154, %s160
          %s162 = smul.addr %s23, 8
          %s163 = sadd.s32 %s158, %s162
          %s164 = smul.addr %s163, 128
          %s165 = scalar_lea.hbm %s0, %s164
          %s167 = sshll.u32 %s157, 4
          %s168 = int_to_ptr.vmem [resolvable:$true] %s167
          %170 = dma.hbm_to_vmem [thread:$0]  %s165, 512, %s168, %s154
        $region28: #{tpu_custom_call.1} parent=23 // pred_fallthru
          _
      $region24: #{tpu_custom_call.1} parent=5 // pred_fallthru
        _
      %p171 = scmp.le.s32.totalorder 1, %s15
      %p172 = scmp.lt.s32.totalorder %s15, 5
      %p173 = pnand %p171, %p172
      %p174 = pneg %p173
      // Predicated region
      $region29: #{tpu_custom_call.1} parent=5 // pred_check
        _
      $region30: #{tpu_custom_call.1} parent=5 // pred_check_branch
        %176 = sbr.rel (%p173) target = $region32
      $region31: #{tpu_custom_call.1} parent=5 // pred_region
        %s177 = ssub.s32 %s15, 1
        %s178 = sand.u32 %s42, 1
        %s179 = scalar_lea.sflag [#allocation3], %s178
        %s180 = sand.u32 %s42, 1
        %s181 = smul.addr %s180, 32
        %s182 = scalar_lea.vmem [#allocation2], %s181
        // Predicated region
        $region33: #{tpu_custom_call.1} parent=31 // pred_check
          %p183 = pneg %p55
        $region34: #{tpu_custom_call.1} parent=31 // pred_check_branch
          %185 = sbr.rel (%p183) target = $region36
        $region35: #{tpu_custom_call.1} parent=31 // pred_region
          %186 = dma.done %s179, 512
        $region36: #{tpu_custom_call.1} parent=31 // pred_fallthru
          _
        %s187 = sand.u32 %s42, 1
        %s188 = scalar_lea.sflag [#allocation3], %s187
        %s189 = sand.u32 %s42, 1
        %s190 = smul.addr %s189, 32
        %s191 = scalar_lea.vmem [#allocation2], %s190
        %p192 = pneg %p55
        %p193 = pneg %p52
        %p194 = pneg %p76
        %p195 = pneg %p73
        %p196 = pneg %p97
        %p197 = pneg %p94
        %p198 = pneg %p125
        %p199 = pneg %p122
        %s200 = sand.u32 %s112, 1
        %s201 = scalar_lea.sflag [#allocation4], %s200
        %s202 = sand.u32 %s112, 1
        %s203 = smul.addr %s202, 32
        %s204 = scalar_lea.vmem [#allocation5], %s203
        %s205 = smul.u32 4, %s24
        %s206 = smul.u32 4, %s24
        %v207 = vld [vmem:[%s182] sm:$0xff]
        %v208 = vld [vmem:[%s182 + $0x8] sm:$0xff]
        %v209 = vld [vmem:[%s182 + $0x10] sm:$0xff]
        %v210 = vld [vmem:[%s182 + $0x18] sm:$0xff]
        %v211 = vld [vmem:[%s2] sm:$0xff]
        %s212 = scalar_lea.vmem %s2, 8
        %v213 = vld [vmem:[%s212] sm:$0xff]
        %s214 = scalar_lea.vmem %s2, 16
        %v215 = vld [vmem:[%s214] sm:$0xff]
        %s216 = scalar_lea.vmem %s2, 24
        %v217 = vld [vmem:[%s216] sm:$0xff]
        %219 = vset.pattern.permute.xlu0 0
        %220 = vperm.xlu0 %219, %v211
        %v221 = vpop.permute.xlu0 %220
        %v223 = vmul.f32 %v221, %v207
        %v224 = vmul.f32 %v221, %v208
        %v225 = vmul.f32 %v221, %v209
        %v226 = vmul.f32 %v221, %v210
        %228 = vset.pattern.permute.xlu0 0
        %229 = vperm.xlu0 %228, %v213
        %v230 = vpop.permute.xlu0 %229
        %v232 = vadd.f32 %v223, %v230
        %v233 = vadd.f32 %v224, %v230
        %v234 = vadd.f32 %v225, %v230
        %v235 = vadd.f32 %v226, %v230
        %v236 = vld [vmem:[%s1] sm:$0xff]
        %vm237 = vcmask 64512
        %v239 = vsel %vm237, %v236, 0
        %241 = vmatprep.subr.mxu0 %v233
        %242 = vmatpush1.msra.mxu0 %v232
        %243 = vmatprep.subr.mxu0 0.0
        %244 = vmatpush1.msra.mxu0 0.0
        %245 = vmatprep.subr.mxu0 0.0
        %246 = vmatpush1.msra.mxu0 0.0
        %247 = vmatprep.subr.mxu0 0.0
        %248 = vmatpush1.msra.mxu0 0.0
        %249 = vmatprep.subr.mxu0 0.0
        %250 = vmatpush1.msra.mxu0 0.0
        %251 = vmatprep.subr.mxu0 0.0
        %252 = vmatpush1.msra.mxu0 0.0
        %253 = vmatprep.subr.mxu0 0.0
        %254 = vmatpush1.msra.mxu0 0.0
        %255 = vmatprep.subr.mxu0 0.0
        %256 = vmatpush1.msra.mxu0 0.0
        %257 = vmatprep.subr.mxu0 0.0
        %258 = vmatpush1.msra.mxu0 0.0
        %259 = vmatprep.subr.mxu0 0.0
        %260 = vmatpush1.msra.mxu0 0.0
        %261 = vmatprep.subr.mxu0 0.0
        %262 = vmatpush1.msra.mxu0 0.0
        %263 = vmatprep.subr.mxu0 0.0
        %264 = vmatpush1.msra.mxu0 0.0
        %265 = vmatprep.subr.mxu0 0.0
        %266 = vmatpush1.msra.mxu0 0.0
        %267 = vmatprep.subr.mxu0 0.0
        %268 = vmatpush1.msra.mxu0 0.0
        %269 = vmatprep.subr.mxu0 0.0
        %270 = vmatpush1.msra.mxu0 0.0
        %271 = vmatprep.subr.mxu0 0.0
        %272 = vmatpush1.msra.mxu0 0.0
        %273 = vmatprep.subr.mxu0 0.0
        %274 = vmatpush1.msra.mxu0 0.0
        %275 = vmatprep.subr.mxu0 0.0
        %276 = vmatpush1.msra.mxu0 0.0
        %277 = vmatprep.subr.mxu0 0.0
        %278 = vmatpush1.msra.mxu0 0.0
        %279 = vmatprep.subr.mxu0 0.0
        %280 = vmatpush1.msra.mxu0 0.0
        %281 = vmatprep.subr.mxu0 0.0
        %282 = vmatpush1.msra.mxu0 0.0
        %283 = vmatprep.subr.mxu0 0.0
        %284 = vmatpush1.msra.mxu0 0.0
        %285 = vmatprep.subr.mxu0 0.0
        %286 = vmatpush1.msra.mxu0 0.0
        %287 = vmatprep.subr.mxu0 0.0
        %288 = vmatpush1.msra.mxu0 0.0
        %289 = vmatprep.subr.mxu0 0.0
        %290 = vmatpush1.msra.mxu0 0.0
        %291 = vmatprep.subr.mxu0 0.0
        %292 = vmatpush1.msra.mxu0 0.0
        %293 = vmatprep.subr.mxu0 0.0
        %294 = vmatpush1.msra.mxu0 0.0
        %295 = vmatprep.subr.mxu0 0.0
        %296 = vmatpush1.msra.mxu0 0.0
        %297 = vmatprep.subr.mxu0 0.0
        %298 = vmatpush1.msra.mxu0 0.0
        %299 = vmatprep.subr.mxu0 0.0
        %300 = vmatpush1.msra.mxu0 0.0
        %301 = vmatprep.subr.mxu0 0.0
        %302 = vmatpush1.msra.mxu0 0.0
        %303 = vmatprep.subr.mxu0 0.0
        %304 = vmatpush1.msra.mxu0 0.0
        %305 = vmatprep.mubr.f32.mxu0 0.0
        %306 = vmatmul.mubr.f32.gmra.mrb[0].mxu0 %v239
        %v307 = vpop.f32.mrb[0].mxu0
        %v308 = vadd.f32 %v207, %v307
        %v309 = vpop.f32.mrb[0].mxu0
        %v310 = vadd.f32 %v208, %v309
        %311 = vdwg.mxu0
        %312 = vmatprep.subr.mxu0 %v235
        %313 = vmatpush1.msra.mxu0 %v234
        %314 = vmatprep.subr.mxu0 0.0
        %315 = vmatpush1.msra.mxu0 0.0
        %316 = vmatprep.subr.mxu0 0.0
        %317 = vmatpush1.msra.mxu0 0.0
        %318 = vmatprep.subr.mxu0 0.0
        %319 = vmatpush1.msra.mxu0 0.0
        %320 = vmatprep.subr.mxu0 0.0
        %321 = vmatpush1.msra.mxu0 0.0
        %322 = vmatprep.subr.mxu0 0.0
        %323 = vmatpush1.msra.mxu0 0.0
        %324 = vmatprep.subr.mxu0 0.0
        %325 = vmatpush1.msra.mxu0 0.0
        %326 = vmatprep.subr.mxu0 0.0
        %327 = vmatpush1.msra.mxu0 0.0
        %328 = vmatprep.subr.mxu0 0.0
        %329 = vmatpush1.msra.mxu0 0.0
        %330 = vmatprep.subr.mxu0 0.0
        %331 = vmatpush1.msra.mxu0 0.0
        %332 = vmatprep.subr.mxu0 0.0
        %333 = vmatpush1.msra.mxu0 0.0
        %334 = vmatprep.subr.mxu0 0.0
        %335 = vmatpush1.msra.mxu0 0.0
        %336 = vmatprep.subr.mxu0 0.0
        %337 = vmatpush1.msra.mxu0 0.0
        %338 = vmatprep.subr.mxu0 0.0
        %339 = vmatpush1.msra.mxu0 0.0
        %340 = vmatprep.subr.mxu0 0.0
        %341 = vmatpush1.msra.mxu0 0.0
        %342 = vmatprep.subr.mxu0 0.0
        %343 = vmatpush1.msra.mxu0 0.0
        %344 = vmatprep.subr.mxu0 0.0
        %345 = vmatpush1.msra.mxu0 0.0
        %346 = vmatprep.subr.mxu0 0.0
        %347 = vmatpush1.msra.mxu0 0.0
        %348 = vmatprep.subr.mxu0 0.0
        %349 = vmatpush1.msra.mxu0 0.0
        %350 = vmatprep.subr.mxu0 0.0
        %351 = vmatpush1.msra.mxu0 0.0
        %352 = vmatprep.subr.mxu0 0.0
        %353 = vmatpush1.msra.mxu0 0.0
        %354 = vmatprep.subr.mxu0 0.0
        %355 = vmatpush1.msra.mxu0 0.0
        %356 = vmatprep.subr.mxu0 0.0
        %357 = vmatpush1.msra.mxu0 0.0
        %358 = vmatprep.subr.mxu0 0.0
        %359 = vmatpush1.msra.mxu0 0.0
        %360 = vmatprep.subr.mxu0 0.0
        %361 = vmatpush1.msra.mxu0 0.0
        %362 = vmatprep.subr.mxu0 0.0
        %363 = vmatpush1.msra.mxu0 0.0
        %364 = vmatprep.subr.mxu0 0.0
        %365 = vmatpush1.msra.mxu0 0.0
        %366 = vmatprep.subr.mxu0 0.0
        %367 = vmatpush1.msra.mxu0 0.0
        %368 = vmatprep.subr.mxu0 0.0
        %369 = vmatpush1.msra.mxu0 0.0
        %370 = vmatprep.subr.mxu0 0.0
        %371 = vmatpush1.msra.mxu0 0.0
        %372 = vmatprep.subr.mxu0 0.0
        %373 = vmatpush1.msra.mxu0 0.0
        %374 = vmatprep.subr.mxu0 0.0
        %375 = vmatpush1.msra.mxu0 0.0
        %376 = vmatprep.mubr.f32.mxu0 0.0
        %377 = vmatmul.mubr.f32.gmra.mrb[0].mxu0 %v239
        %v378 = vpop.f32.mrb[0].mxu0
        %v379 = vadd.f32 %v209, %v378
        %v380 = vpop.f32.mrb[0].mxu0
        %v381 = vadd.f32 %v210, %v380
        %382 = vdwg.mxu0
        %384 = vset.pattern.permute.xlu0 0
        %385 = vperm.xlu0 %384, %v215
        %v386 = vpop.permute.xlu0 %385
        %v388 = vmul.f32 %v386, %v308
        %v389 = vmul.f32 %v386, %v310
        %v390 = vmul.f32 %v386, %v379
        %v391 = vmul.f32 %v386, %v381
        %393 = vset.pattern.permute.xlu0 0
        %394 = vperm.xlu0 %393, %v217
        %v395 = vpop.permute.xlu0 %394
        %v397 = vadd.f32 %v388, %v395
        %v398 = vadd.f32 %v389, %v395
        %v399 = vadd.f32 %v390, %v395
        %v400 = vadd.f32 %v391, %v395
        %v401 = vmax.f32 %v397, -1.0
        %v402 = vmax.f32 %v398, -1.0
        %v403 = vmax.f32 %v399, -1.0
        %v404 = vmax.f32 %v400, -1.0
        %v405 = vmin.f32 %v401, 1.0
        %v406 = vmin.f32 %v402, 1.0
        %v407 = vmin.f32 %v403, 1.0
        %v408 = vmin.f32 %v404, 1.0
        %409 = vst [vmem:[%s204] sm:$0xff] %v405
        %410 = vst [vmem:[%s204 + $0x8] sm:$0xff] %v406
        %411 = vst [vmem:[%s204 + $0x10] sm:$0xff] %v407
        %412 = vst [vmem:[%s204 + $0x18] sm:$0xff] %v408
        %s413 = sand.u32 %s112, 1
        %s414 = scalar_lea.sflag [#allocation4], %s413
        %s415 = sand.u32 %s112, 1
        %s416 = smul.addr %s415, 32
        %s417 = scalar_lea.vmem [#allocation5], %s416
        // Predicated region
        $region37: #{tpu_custom_call.1} parent=31 // pred_check
          %p418 = pneg %p122
        $region38: #{tpu_custom_call.1} parent=31 // pred_check_branch
          %420 = sbr.rel (%p418) target = $region40
        $region39: #{tpu_custom_call.1} parent=31 // pred_region
          %s421 = smul.u32 4, %s24
          %s423 = ssub.s32 512, 512
          %424 = vsyncadd %s414, %s423
          %s425 = smul.addr %s25, 8
          %s426 = sadd.s32 %s421, %s425
          %s427 = smul.addr %s426, 128
          %s428 = scalar_lea.hbm %s3, %s427
          %s430 = sshll.u32 %s417, 4
          %s431 = int_to_ptr.vmem [resolvable:$true] %s430
          %433 = dma.vmem_to_hbm [thread:$0]  %s431, 512, %s428, %s414
        $region40: #{tpu_custom_call.1} parent=31 // pred_fallthru
          _
      $region32: #{tpu_custom_call.1} parent=5 // pred_fallthru
        _
      %p434 = scmp.le.s32.totalorder 2, %s15
      // Predicated region
      $region41: #{tpu_custom_call.1} parent=5 // pred_check
        %p435 = pneg %p434
      $region42: #{tpu_custom_call.1} parent=5 // pred_check_branch
        %437 = sbr.rel (%p435) target = $region44
      $region43: #{tpu_custom_call.1} parent=5 // pred_region
        %s438 = ssub.s32 %s15, 2
        // Predicated region
        $region45: #{tpu_custom_call.1} parent=43 // pred_check
          %p439 = pneg %p128
        $region46: #{tpu_custom_call.1} parent=43 // pred_check_branch
          %441 = sbr.rel (%p439) target = $region48
        $region47: #{tpu_custom_call.1} parent=43 // pred_region
          %s442 = sand.u32 %s113, 1
          %s443 = scalar_lea.sflag [#allocation4], %s442
          %s444 = sand.u32 %s113, 1
          %s445 = smul.addr %s444, 32
          %s446 = scalar_lea.vmem [#allocation5], %s445
          %447 = dma.done %s443, 512
        $region48: #{tpu_custom_call.1} parent=43 // pred_fallthru
          _
      $region44: #{tpu_custom_call.1} parent=5 // pred_fallthru
        _
    $region6: #{tpu_custom_call.1} parent=1 // loop_footer
      %s19 = sadd.s32 1, %s15
    $region7: #{tpu_custom_call.1} parent=1 // loop_footer_branch
      %14 = sbr.rel target = $region3
    $region8: #{tpu_custom_call.1} parent=1 // loop_exit
      _
    %448 = vsyncpa [#allocation3], 1
    %s449 = scalar_lea.sflag [#allocation3], 1
    %450 = vsyncpa %s449, 1
    %451 = vsyncpa [#allocation4], 1
    %s452 = scalar_lea.sflag [#allocation4], 1
    %453 = vsyncpa %s452, 1

</llo_original>
